<compile_context>
chip_gen: v7x
topology: tpu7x:2x2x1
jax: 0.10.0
libtpu: 0.0.40
codegen_flags: <defaults>
</compile_context>

<pallas_src>
import functools

import jax
import jax.numpy as jnp
from jax.experimental import pallas as pl
from jax.experimental.pallas import tpu as pltpu


def _round_up(x, m):
    return ((x + m - 1) // m) * m


# ------------------------- Pallas kernel (hot path) -------------------------

def _mlp_maxpool_kernel(gx_ref, w1_ref, b1_ref, w2_ref, b2_ref, o_ref, *, K, TM, Cp):
    # gx_ref: (1, K, TM, Cf) bf16   [rel_p | gathered features]
    # w1_ref: (Cf, Cp) bf16, w2_ref: (Cp, Cp) bf16   (BN scales folded in)
    # b1_ref, b2_ref: (1, Cp) f32 folded BN biases
    # o_ref: (1, TM, Cp) f32 max-pooled output
    Cf = gx_ref.shape[-1]
    x = gx_ref[0].reshape(K * TM, Cf)                       # layout-preserving (TM % 8 == 0)
    # conv1 (1x1) == one long GEMM over all K*TM rows, f32 accumulate
    h = jnp.dot(x, w1_ref[...], preferred_element_type=jnp.float32)
    h = jnp.maximum(h + b1_ref[...], 0.0)                   # (1,Cp) sublane-broadcast bias + ReLU
    # conv2 (1x1) == one long GEMM
    h = jnp.dot(h.astype(jnp.bfloat16), w2_ref[...],
                preferred_element_type=jnp.float32)
    h = (h + b2_ref[...]).reshape(K, TM, Cp)
    # max-pool over the K neighbors; final ReLU after the pool (equivalent).
    o_ref[0] = jnp.maximum(jnp.max(h, axis=0), 0.0)


def _pick_tile(M, K, Cf, Cp, vmem_budget_bytes=20 << 20):
    """Pick the query-point tile TM (sublane aligned, capped at 512) and padded Mp."""
    # Per-query-row VMEM cost: double-buffered bf16 input block, double-buffered
    # f32 output block, plus the two (K, Cp) f32 GEMM intermediates in-kernel.
    per_row = 2 * K * Cf * 2 + 2 * Cp * 4 + 2 * K * Cp * 4
    tm_cap = max(8, (vmem_budget_bytes // per_row) // 8 * 8)
    tm = min(512, tm_cap)                # 512 stays inside v7x's 32 MiB scoped default
    if M <= tm:
        tm = _round_up(M, 8)             # single tile per batch, sublane-aligned
        return tm, tm
    return tm, _round_up(M, tm)


def mlp_maxpool(grouped, w1, b1, w2, b2, *, TM):
    """grouped: [B,K,Mp,Cf] bf16 -> [B, Mp, Cp] f32 (MLP + max over K)."""
    B, K, Mp, Cf = grouped.shape
    Cp = w2.shape[-1]
    assert Mp % TM == 0 and TM % 8 == 0

    kernel = functools.partial(_mlp_maxpool_kernel, K=K, TM=TM, Cp=Cp)
    return pl.pallas_call(
        kernel,
        out_shape=jax.ShapeDtypeStruct((B, Mp, Cp), jnp.float32),
        grid=(B, Mp // TM),
        in_specs=[
            pl.BlockSpec((1, K, TM, Cf), lambda b, i: (b, 0, i, 0)),
            pl.BlockSpec((Cf, Cp), lambda b, i: (0, 0)),
            pl.BlockSpec((1, Cp), lambda b, i: (0, 0)),
            pl.BlockSpec((Cp, Cp), lambda b, i: (0, 0)),
            pl.BlockSpec((1, Cp), lambda b, i: (0, 0)),
        ],
        out_specs=pl.BlockSpec((1, TM, Cp), lambda b, i: (b, i, 0)),
        compiler_params=pltpu.CompilerParams(
            dimension_semantics=("parallel", "parallel"),
            vmem_limit_bytes=32 << 20),
    )(grouped, w1, b1, w2, b2)


# ---------------------------- JAX glue (indexing) ----------------------------

def farthest_point_sampling(xyz, npoint):
    """xyz: [B, N, C] -> centroids [B, npoint] (int32). Deterministic start at idx 0."""
    B, N, _ = xyz.shape

    def body(i, state):
        centroids, distance, farthest = state
        centroids = centroids.at[:, i].set(farthest)
        centroid = jnp.take_along_axis(xyz, farthest[:, None, None], axis=1)  # [B,1,C]
        dist = jnp.sum((xyz - centroid) ** 2, axis=-1)                        # [B,N]
        distance = jnp.minimum(distance, dist)
        farthest = jnp.argmax(distance, axis=-1).astype(jnp.int32)
        return centroids, distance, farthest

    init = (jnp.zeros((B, npoint), jnp.int32),
            jnp.full((B, N), 1e10, jnp.float32),
            jnp.zeros((B,), jnp.int32))
    centroids, _, _ = jax.lax.fori_loop(0, npoint, body, init)
    return centroids


def knn_point(k, xyz, new_xyz):
    """xyz: [B,N,3], new_xyz: [B,M,3] -> idx [B,M,k] of nearest neighbors.

    Matches the PyTorch reference's mask=None path: points exactly at the origin
    are treated as padding and pushed to +inf distance.
    """
    sq = jnp.sum((new_xyz[:, :, None, :] - xyz[:, None, :, :]) ** 2, axis=-1)  # [B,M,N]
    zero_mask = jnp.all(xyz == 0, axis=-1)                                     # [B,N]
    sq = jnp.where(zero_mask[:, None, :], jnp.inf, sq)
    _, idx = jax.lax.top_k(-sq, k)                                             # O(N*k), not argsort
    return idx


def index_points(points, idx):
    """points: [B,N,C], idx: [B,K,M] -> [B,K,M,C]."""
    return jax.vmap(lambda pts, ix: pts[ix])(points, idx)


def transition_down_forward(p1, x1, w1, s1, b1, w2, s2, b2, *, stride, num_neighbors):
    """p1: [B,N,3], x1: [B,C_in,N] (PyTorch feature layout). Returns ([p2, feats], None).

    w1: [C_out, 3+C_in], w2: [C_out, C_out] (1x1 conv weights, squeezed)
    s1,b1,s2,b2: [C_out] folded BatchNorm scale/bias (eval mode).
    """
    B, N, _ = p1.shape
    Cin = x1.shape[1]
    Cout = w1.shape[0]
    K = num_neighbors
    M = max(1, N // stride)
    Cf = 3 + Cin

    # ---- sampling / kNN (XLA) ----
    idx = farthest_point_sampling(p1, M)                                   # [B,M]
    p2 = jnp.take_along_axis(p1, idx[:, :, None], axis=1)                  # [B,M,3]
    idx_knn = knn_point(K, p1, p2)                                         # [B,M,K]

    # ---- tile sizing; pad the cheap index/query arrays, not the gathered tensors ----
    Cp = _round_up(Cout, 128)
    TM, Mp = _pick_tile(M, K, Cf, Cp)
    if Mp != M:
        idx_knn = jnp.pad(idx_knn, ((0, 0), (0, Mp - M), (0, 0)))          # pad with idx 0
        p2_pad = jnp.pad(p2, ((0, 0), (0, Mp - M), (0, 0)))
    else:
        p2_pad = p2

    # ---- grouping: gather directly at padded size, bf16, rel_p fused as channels ----
    idx_t = jnp.transpose(idx_knn, (0, 2, 1))                              # [B,K,Mp]
    grouped_p1 = index_points(p1, idx_t)                                   # [B,K,Mp,3]
    rel_p = (grouped_p1 - p2_pad[:, None, :, :]).astype(jnp.bfloat16)      # [B,K,Mp,3]
    x1_bf = jnp.transpose(x1, (0, 2, 1)).astype(jnp.bfloat16)              # cast before gather
    grouped_x1 = index_points(x1_bf, idx_t)                                # [B,K,Mp,Cin] bf16
    grouped = jnp.concatenate([rel_p, grouped_x1], axis=-1)                # [B,K,Mp,Cf] bf16

    # ---- weight prep: fold BN scales, pad C_out to lane-dense Cp ----
    w1f = jnp.transpose(w1) * s1[None, :]                                  # (Cf, Cout)
    w2f = jnp.transpose(w2) * s2[None, :]                                  # (Cout, Cout)
    w1p = jnp.zeros((Cf, Cp), jnp.float32).at[:, :Cout].set(w1f).astype(jnp.bfloat16)
    w2p = jnp.zeros((Cp, Cp), jnp.float32).at[:Cout, :Cout].set(w2f).astype(jnp.bfloat16)
    b1p = jnp.zeros((1, Cp), jnp.float32).at[0, :Cout].set(b1)
    b2p = jnp.zeros((1, Cp), jnp.float32).at[0, :Cout].set(b2)

    out = mlp_maxpool(grouped, w1p, b1p, w2p, b2p, TM=TM)                  # [B,Mp,Cp] f32

    new_features = jnp.transpose(out[:, :M, :Cout], (0, 2, 1))             # [B,C_out,M]
    return [p2, new_features], None


# ---------------------------------- driver -----------------------------------

if __name__ == "__main__":
    B, N, C_in = 2, 64, 8
    coord_dims, C_out = 3, 16
    stride, num_neighbors = 4, 8   # M = N // stride = 16

    key = jax.random.PRNGKey(0)
    k1, k2, k3, k4, k5, k6, k7, k8 = jax.random.split(key, 8)

    p1 = jax.random.normal(k1, (B, N, coord_dims), jnp.float32)
    x1 = jax.random.normal(k2, (B, C_in, N), jnp.float32)

    # Deterministic parameter init (Conv2d 1x1 weights squeezed, BN affine params).
    w1 = 0.1 * jax.random.normal(k3, (C_out, C_in + coord_dims), jnp.float32)
    w2 = 0.1 * jax.random.normal(k4, (C_out, C_out), jnp.float32)
    gamma1 = jax.random.uniform(k5, (C_out,), jnp.float32, 0.5, 1.5)
    beta1 = 0.1 * jax.random.normal(k6, (C_out,), jnp.float32)
    gamma2 = jax.random.uniform(k7, (C_out,), jnp.float32, 0.5, 1.5)
    beta2 = 0.1 * jax.random.normal(k8, (C_out,), jnp.float32)

    eps = 1e-5  # BN folded with running_mean=0, running_var=1 (fresh init, eval mode)
    s1 = gamma1 / jnp.sqrt(1.0 + eps)
    b1 = beta1
    s2 = gamma2 / jnp.sqrt(1.0 + eps)
    b2 = beta2

    (p2, new_features), new_mask = transition_down_forward(
        p1, x1, w1, s1, b1, w2, s2, b2, stride=stride, num_neighbors=num_neighbors)

    jax.block_until_ready(new_features)
    assert p2.shape == (B, N // stride, coord_dims)
    assert new_features.shape == (B, C_out, N // stride)
    assert bool(jnp.all(jnp.isfinite(new_features)))
    print("KERNEL_OK")
</pallas_src>

<mosaic_0001>
module attributes {stable_mosaic.version = 11 : i64} {
  func.func @_mlp_maxpool_kernel(%arg0: i32, %arg1: i32, %arg2: memref<1x8x16x11xbf16, #tpu.memory_space<vmem>>, %arg3: memref<11x128xbf16, #tpu.memory_space<vmem>>, %arg4: memref<1x128xf32, #tpu.memory_space<vmem>>, %arg5: memref<128x128xbf16, #tpu.memory_space<vmem>>, %arg6: memref<1x128xf32, #tpu.memory_space<vmem>>, %arg7: memref<1x16x128xf32, #tpu.memory_space<vmem>>) attributes {dimension_semantics = [#tpu.dimension_semantics<parallel>, #tpu.dimension_semantics<parallel>], iteration_bounds = array<i64: 2, 1>, scalar_prefetch = 0 : i64, scratch_operands = 0 : i64, tpu.core_type = #tpu.core_type<tc>, window_params = [{transform_indices = @transform_0, window_bounds = array<i64: 1, 8, 16, 11>}, {pipeline_mode = #tpu.pipeline_mode<synchronous>, transform_indices = @transform_1, window_bounds = array<i64: 11, 128>}, {pipeline_mode = #tpu.pipeline_mode<synchronous>, transform_indices = @transform_2, window_bounds = array<i64: 1, 128>}, {pipeline_mode = #tpu.pipeline_mode<synchronous>, transform_indices = @transform_3, window_bounds = array<i64: 128, 128>}, {pipeline_mode = #tpu.pipeline_mode<synchronous>, transform_indices = @transform_4, window_bounds = array<i64: 1, 128>}, {transform_indices = @transform_5, window_bounds = array<i64: 1, 16, 128>}]} {
    %c0 = arith.constant 0 : index
    %c0_0 = arith.constant 0 : index
    %c0_1 = arith.constant 0 : index
    %c0_2 = arith.constant 0 : index
    %0 = vector.load %arg2[%c0, %c0_0, %c0_1, %c0_2] : memref<1x8x16x11xbf16, #tpu.memory_space<vmem>>, vector<1x8x16x11xbf16>
    %1 = vector.shape_cast %0 : vector<1x8x16x11xbf16> to vector<8x16x11xbf16>
    %2 = vector.shape_cast %1 : vector<8x16x11xbf16> to vector<128x11xbf16>
    %c0_3 = arith.constant 0 : index
    %c0_4 = arith.constant 0 : index
    %3 = vector.load %arg3[%c0_3, %c0_4] : memref<11x128xbf16, #tpu.memory_space<vmem>>, vector<11x128xbf16>
    %cst = arith.constant dense<0.000000e+00> : vector<128x128xf32>
    %4 = tpu.matmul %2, %3, %cst {dimension_numbers = #tpu.dot_dimension_numbers<[1], [0], [0], [1], [0, 0, 1, 1], [], []>} : vector<128x11xbf16>, vector<11x128xbf16>, vector<128x128xf32> -> vector<128x128xf32>
    %c0_5 = arith.constant 0 : index
    %c0_6 = arith.constant 0 : index
    %5 = vector.load %arg4[%c0_5, %c0_6] : memref<1x128xf32, #tpu.memory_space<vmem>>, vector<1x128xf32>
    %6 = vector.broadcast %5 : vector<1x128xf32> to vector<128x128xf32>
    %7 = arith.addf %4, %6 : vector<128x128xf32>
    %cst_7 = arith.constant 0.000000e+00 : f32
    %8 = vector.broadcast %cst_7 : f32 to vector<128x128xf32>
    %9 = arith.maximumf %7, %8 : vector<128x128xf32>
    %10 = arith.truncf %9 : vector<128x128xf32> to vector<128x128xbf16>
    %c0_8 = arith.constant 0 : index
    %c0_9 = arith.constant 0 : index
    %11 = vector.load %arg5[%c0_8, %c0_9] : memref<128x128xbf16, #tpu.memory_space<vmem>>, vector<128x128xbf16>
    %cst_10 = arith.constant dense<0.000000e+00> : vector<128x128xf32>
    %12 = tpu.matmul %10, %11, %cst_10 {dimension_numbers = #tpu.dot_dimension_numbers<[1], [0], [0], [1], [0, 0, 1, 1], [], []>} : vector<128x128xbf16>, vector<128x128xbf16>, vector<128x128xf32> -> vector<128x128xf32>
    %c0_11 = arith.constant 0 : index
    %c0_12 = arith.constant 0 : index
    %13 = vector.load %arg6[%c0_11, %c0_12] : memref<1x128xf32, #tpu.memory_space<vmem>>, vector<1x128xf32>
    %14 = vector.broadcast %13 : vector<1x128xf32> to vector<128x128xf32>
    %15 = arith.addf %12, %14 : vector<128x128xf32>
    %16 = vector.shape_cast %15 : vector<128x128xf32> to vector<8x16x128xf32>
    %cst_13 = arith.constant dense<0xFF800000> : vector<16x128xf32>
    %17 = vector.multi_reduction <maximumf>, %16, %cst_13 [0] : vector<8x16x128xf32> to vector<16x128xf32>
    %cst_14 = arith.constant 0.000000e+00 : f32
    %18 = vector.broadcast %cst_14 : f32 to vector<16x128xf32>
    %19 = arith.maximumf %17, %18 : vector<16x128xf32>
    %c0_15 = arith.constant 0 : index
    %c0_16 = arith.constant 0 : index
    %c0_17 = arith.constant 0 : index
    %20 = vector.load %arg7[%c0_15, %c0_16, %c0_17] : memref<1x16x128xf32, #tpu.memory_space<vmem>>, vector<1x16x128xf32>
    %21 = vector.shape_cast %20 : vector<1x16x128xf32> to vector<16x128xf32>
    %22 = vector.shape_cast %19 : vector<16x128xf32> to vector<1x16x128xf32>
    tpu.vector_store %arg7[%c0_15, %c0_16, %c0_17], %22 {strides = array<i32>} : memref<1x16x128xf32, #tpu.memory_space<vmem>>, vector<1x16x128xf32>,
    return
  }
  func.func @transform_0(%arg0: i32, %arg1: i32) -> (i32, i32, i32, i32) {
    %c0_i32 = arith.constant 0 : i32
    %c0_i32_0 = arith.constant 0 : i32
    %c0_i32_1 = arith.constant 0 : i32
    return %arg0, %c0_i32, %arg1, %c0_i32_0 : i32, i32, i32, i32
  }
  func.func @transform_1(%arg0: i32, %arg1: i32) -> (i32, i32) {
    %c0_i32 = arith.constant 0 : i32
    %c0_i32_0 = arith.constant 0 : i32
    %c0_i32_1 = arith.constant 0 : i32
    return %c0_i32, %c0_i32_0 : i32, i32
  }
  func.func @transform_2(%arg0: i32, %arg1: i32) -> (i32, i32) {
    %c0_i32 = arith.constant 0 : i32
    %c0_i32_0 = arith.constant 0 : i32
    %c0_i32_1 = arith.constant 0 : i32
    return %c0_i32, %c0_i32_0 : i32, i32
  }
  func.func @transform_3(%arg0: i32, %arg1: i32) -> (i32, i32) {
    %c0_i32 = arith.constant 0 : i32
    %c0_i32_0 = arith.constant 0 : i32
    %c0_i32_1 = arith.constant 0 : i32
    return %c0_i32, %c0_i32_0 : i32, i32
  }
  func.func @transform_4(%arg0: i32, %arg1: i32) -> (i32, i32) {
    %c0_i32 = arith.constant 0 : i32
    %c0_i32_0 = arith.constant 0 : i32
    %c0_i32_1 = arith.constant 0 : i32
    return %c0_i32, %c0_i32_0 : i32, i32
  }
  func.func @transform_5(%arg0: i32, %arg1: i32) -> (i32, i32, i32) {
    %c0_i32 = arith.constant 0 : i32
    %c0_i32_0 = arith.constant 0 : i32
    return %arg0, %arg1, %c0_i32 : i32, i32, i32
  }
}

</mosaic_0001>

<llo_original>
// kernel: tpu_custom_call.1
$region0: #{tpu_custom_call.1}
  #allocation0 [shape = 'u32[]', space=smem, size = 0x4, offset = 0x4, fixed_abs, tag = 'smem constant byte address 0x4 - core index']
  #allocation1 [shape = 'u32[144,128]{1,0:T(1,128)}', space=vmem, size = 0x12000, scoped, tag = 'internal scratch']
  %s0 = inlined_call_operand.vmem [shape: bf16[2,8,16,11], index: 0, kind: input, shape index: {}]
  %s1 = inlined_call_operand.vmem [shape: bf16[11,128], index: 1, kind: input, shape index: {}]
  %s2 = inlined_call_operand.vmem [shape: f32[1,128], index: 2, kind: input, shape index: {}]
  %s3 = inlined_call_operand.vmem [shape: bf16[128,128], index: 3, kind: input, shape index: {}]
  %s4 = inlined_call_operand.vmem [shape: f32[1,128], index: 4, kind: input, shape index: {}]
  %s5 = inlined_call_operand.hbm [shape: f32[2,16,128], index: 5, kind: output, shape index: {}]
  %s6 = sld [smem:[#allocation0]]
  $region53: #{tpu_custom_call.1} parent=0
    _
  %s8 = ssub.s32 1, %s6
  %s9 = scalar_select 0, %s8, %s6
  $region1: #{tpu_custom_call.1} parent=0
    #allocation2 [shape = 'u8[16384]{0}', space=vmem, size = 0x4000, scoped, tag = 'output window, operand 0']
    #allocation3 [shape = 's32[2]{0}', space=sflag, size = 0x8, scoped, tag = 'scoped memory for tpu_custom_call.1']
    %10 = vsyncpa [#allocation3], 0
    %s11 = scalar_lea.sflag [#allocation3], 1
    %12 = vsyncpa %s11, 0
    loop: start=0, step=1, limit=4
    $region2: #{tpu_custom_call.1} parent=1 // loop_pre_header
      _
    $region3: #{tpu_custom_call.1} parent=1 // loop_header
      %s14 = sphi 0, %s18
      %p15 = scmp.ge.s32.totalorder %s14, 4
      %s21 = sphi 0, %s33
      %s22 = sphi 0, %s29
      %s23 = sphi 0, %s21
      %s24 = sphi 0, %s22
      %s25 = sphi 0, %s23
      %s26 = sphi 0, %s24
      %s38 = sphi 0, %s40
      %s41 = sphi 0, %s38
      %s42 = sphi 0, %s41
      %s58 = sphi 0, %s42
      %s62 = sphi 0, %s62
      %s64 = sphi 0, %s62
      %s65 = sphi 0, %s64
      %s79 = sphi 0, %s65
      %s83 = sphi 0, %s83
      %s85 = sphi 0, %s83
      %s86 = sphi 0, %s85
      %s100 = sphi 0, %s86
      %s104 = sphi 0, %s104
      %s106 = sphi 0, %s104
      %s107 = sphi 0, %s106
      %s121 = sphi 0, %s107
      %s125 = sphi 0, %s125
      %s127 = sphi 0, %s125
      %s128 = sphi 0, %s127
      %s142 = sphi 0, %s128
      %s150 = sphi 0, %s152
      %s153 = sphi 0, %s150
      %s154 = sphi 0, %s153
      %s170 = sphi 0, %s154
    $region4: #{tpu_custom_call.1} parent=1 // loop_header_branch
      %17 = sbr.rel (%p15) target = $region8
    $region5: #{tpu_custom_call.1} parent=1 // loop_body
      %s19 = ssub.s32 %s14, 1
      %s20 = ssub.s32 %s14, 2
      %s27 = sadd.s32 1, %s22
      %p28 = scmp.ge.s32.totalorder %s27, 1
      %s29 = scalar_select %p28, 0, %s27
      %s30 = sadd.s32 1, %s21
      %s31 = scalar_select %p28, %s30, %s21
      %p32 = scmp.ge.s32.totalorder %s31, 2
      %s33 = scalar_select %p32, 0, %s31
      %s34 = ssub.s32 %s21, %s33
      %s35 = ssub.s32 %s22, %s29
      %s36 = sor.u32 %s34, %s35
      %p37 = scmp.eq.s32.totalorder %s36, 0
      %s39 = sadd.s32 %s38, 1
      %s40 = scalar_select %p37, %s38, %s39
      %p43 = pneg %p37
      %p44 = scmp.eq.s32.totalorder %s14, 1
      %p45 = por %p43, %p44
      %p46 = scmp.ne.s32.totalorder %s38, %s41
      %p47 = scmp.eq.s32.totalorder %s14, 0
      %p48 = por %p46, %p47
      %p49 = scmp.ne.s32.totalorder %s38, %s41
      %p50 = scmp.eq.s32.totalorder %s19, 1
      %p51 = por %p49, %p50
      %p52 = scmp.ne.s32.totalorder %s41, %s42
      %p53 = scmp.eq.s32.totalorder %s19, 0
      %p54 = por %p52, %p53
      %p55 = scmp.ne.s32.totalorder %s41, %s42
      %p56 = scmp.eq.s32.totalorder %s20, 1
      %p57 = por %p55, %p56
      %p59 = scmp.ne.s32.totalorder %s42, %s58
      %p60 = scmp.eq.s32.totalorder %s20, 0
      %p61 = por %p59, %p60
      %s63 = sadd.s32 %s62, 1
      %p66 = scmp.eq.s32.totalorder %s14, 1
      %p67 = scmp.ne.s32.totalorder %s62, %s64
      %p68 = scmp.eq.s32.totalorder %s14, 0
      %p69 = por %p67, %p68
      %p70 = scmp.ne.s32.totalorder %s62, %s64
      %p71 = scmp.eq.s32.totalorder %s19, 1
      %p72 = por %p70, %p71
      %p73 = scmp.ne.s32.totalorder %s64, %s65
      %p74 = scmp.eq.s32.totalorder %s19, 0
      %p75 = por %p73, %p74
      %p76 = scmp.ne.s32.totalorder %s64, %s65
      %p77 = scmp.eq.s32.totalorder %s20, 1
      %p78 = por %p76, %p77
      %p80 = scmp.ne.s32.totalorder %s65, %s79
      %p81 = scmp.eq.s32.totalorder %s20, 0
      %p82 = por %p80, %p81
      %s84 = sadd.s32 %s83, 1
      %p87 = scmp.eq.s32.totalorder %s14, 1
      %p88 = scmp.ne.s32.totalorder %s83, %s85
      %p89 = scmp.eq.s32.totalorder %s14, 0
      %p90 = por %p88, %p89
      %p91 = scmp.ne.s32.totalorder %s83, %s85
      %p92 = scmp.eq.s32.totalorder %s19, 1
      %p93 = por %p91, %p92
      %p94 = scmp.ne.s32.totalorder %s85, %s86
      %p95 = scmp.eq.s32.totalorder %s19, 0
      %p96 = por %p94, %p95
      %p97 = scmp.ne.s32.totalorder %s85, %s86
      %p98 = scmp.eq.s32.totalorder %s20, 1
      %p99 = por %p97, %p98
      %p101 = scmp.ne.s32.totalorder %s86, %s100
      %p102 = scmp.eq.s32.totalorder %s20, 0
      %p103 = por %p101, %p102
      %s105 = sadd.s32 %s104, 1
      %p108 = scmp.eq.s32.totalorder %s14, 1
      %p109 = scmp.ne.s32.totalorder %s104, %s106
      %p110 = scmp.eq.s32.totalorder %s14, 0
      %p111 = por %p109, %p110
      %p112 = scmp.ne.s32.totalorder %s104, %s106
      %p113 = scmp.eq.s32.totalorder %s19, 1
      %p114 = por %p112, %p113
      %p115 = scmp.ne.s32.totalorder %s106, %s107
      %p116 = scmp.eq.s32.totalorder %s19, 0
      %p117 = por %p115, %p116
      %p118 = scmp.ne.s32.totalorder %s106, %s107
      %p119 = scmp.eq.s32.totalorder %s20, 1
      %p120 = por %p118, %p119
      %p122 = scmp.ne.s32.totalorder %s107, %s121
      %p123 = scmp.eq.s32.totalorder %s20, 0
      %p124 = por %p122, %p123
      %s126 = sadd.s32 %s125, 1
      %p129 = scmp.eq.s32.totalorder %s14, 1
      %p130 = scmp.ne.s32.totalorder %s125, %s127
      %p131 = scmp.eq.s32.totalorder %s14, 0
      %p132 = por %p130, %p131
      %p133 = scmp.ne.s32.totalorder %s125, %s127
      %p134 = scmp.eq.s32.totalorder %s19, 1
      %p135 = por %p133, %p134
      %p136 = scmp.ne.s32.totalorder %s127, %s128
      %p137 = scmp.eq.s32.totalorder %s19, 0
      %p138 = por %p136, %p137
      %p139 = scmp.ne.s32.totalorder %s127, %s128
      %p140 = scmp.eq.s32.totalorder %s20, 1
      %p141 = por %p139, %p140
      %p143 = scmp.ne.s32.totalorder %s128, %s142
      %p144 = scmp.eq.s32.totalorder %s20, 0
      %p145 = por %p143, %p144
      %s146 = ssub.s32 %s21, %s33
      %s147 = ssub.s32 %s22, %s29
      %s148 = sor.u32 %s146, %s147
      %p149 = scmp.eq.s32.totalorder %s148, 0
      %s151 = sadd.s32 %s150, 1
      %s152 = scalar_select %p149, %s150, %s151
      %p155 = pneg %p149
      %p156 = scmp.eq.s32.totalorder %s14, 1
      %p157 = por %p155, %p156
      %p158 = scmp.ne.s32.totalorder %s150, %s153
      %p159 = scmp.eq.s32.totalorder %s14, 0
      %p160 = por %p158, %p159
      %p161 = scmp.ne.s32.totalorder %s150, %s153
      %p162 = scmp.eq.s32.totalorder %s19, 1
      %p163 = por %p161, %p162
      %p164 = scmp.ne.s32.totalorder %s153, %s154
      %p165 = scmp.eq.s32.totalorder %s19, 0
      %p166 = por %p164, %p165
      %p167 = scmp.ne.s32.totalorder %s153, %s154
      %p168 = scmp.eq.s32.totalorder %s20, 1
      %p169 = por %p167, %p168
      %p171 = scmp.ne.s32.totalorder %s154, %s170
      %p172 = scmp.eq.s32.totalorder %s20, 0
      %p173 = por %p171, %p172
      %p174 = scmp.le.s32.totalorder 1, %s14
      %p175 = scmp.lt.s32.totalorder %s14, 3
      %p176 = pnand %p174, %p175
      %p177 = pneg %p176
      // Predicated region
      $region9: #{tpu_custom_call.1} parent=5 // pred_check
        _
      $region10: #{tpu_custom_call.1} parent=5 // pred_check_branch
        %179 = sbr.rel (%p176) target = $region12
      $region11: #{tpu_custom_call.1} parent=5 // pred_region
        %s180 = ssub.s32 %s14, 1
        // Predicated region
        $region13: #{tpu_custom_call.1} parent=11 // pred_check
          %p181 = pneg %p75
        $region14: #{tpu_custom_call.1} parent=11 // pred_check_branch
          %183 = sbr.rel (%p181) target = $region16
        $region15: #{tpu_custom_call.1} parent=11 // pred_region
          _
        $region16: #{tpu_custom_call.1} parent=11 // pred_fallthru
          _
        // Predicated region
        $region17: #{tpu_custom_call.1} parent=11 // pred_check
          %p184 = pneg %p96
        $region18: #{tpu_custom_call.1} parent=11 // pred_check_branch
          %186 = sbr.rel (%p184) target = $region20
        $region19: #{tpu_custom_call.1} parent=11 // pred_region
          _
        $region20: #{tpu_custom_call.1} parent=11 // pred_fallthru
          _
        // Predicated region
        $region21: #{tpu_custom_call.1} parent=11 // pred_check
          %p187 = pneg %p117
        $region22: #{tpu_custom_call.1} parent=11 // pred_check_branch
          %189 = sbr.rel (%p187) target = $region24
        $region23: #{tpu_custom_call.1} parent=11 // pred_region
          _
        $region24: #{tpu_custom_call.1} parent=11 // pred_fallthru
          _
        // Predicated region
        $region25: #{tpu_custom_call.1} parent=11 // pred_check
          %p190 = pneg %p138
        $region26: #{tpu_custom_call.1} parent=11 // pred_check_branch
          %192 = sbr.rel (%p190) target = $region28
        $region27: #{tpu_custom_call.1} parent=11 // pred_region
          _
        $region28: #{tpu_custom_call.1} parent=11 // pred_fallthru
          _
      $region12: #{tpu_custom_call.1} parent=5 // pred_fallthru
        _
      %p193 = scmp.lt.s32.totalorder %s14, 2
      // Predicated region
      $region29: #{tpu_custom_call.1} parent=5 // pred_check
        %p194 = pneg %p193
      $region30: #{tpu_custom_call.1} parent=5 // pred_check_branch
        %196 = sbr.rel (%p194) target = $region32
      $region31: #{tpu_custom_call.1} parent=5 // pred_region
        // Predicated region
        $region33: #{tpu_custom_call.1} parent=31 // pred_check
          %p197 = pneg %p48
        $region34: #{tpu_custom_call.1} parent=31 // pred_check_branch
          %199 = sbr.rel (%p197) target = $region36
        $region35: #{tpu_custom_call.1} parent=31 // pred_region
          %s200 = smul.u32 2, %s22
          %p201 = scmp.lt.s32.totalorder %s21, 1
          %s202 = scalar_select %p201, %s21, 1
          %p203 = scmp.lt.s32.totalorder %s200, 1
          %s204 = scalar_select %p203, %s200, 1
          %s205 = smul.addr %s202, 16
          %s206 = sadd.s32 %s204, %s205
          %s207 = smul.addr %s206, 4
          %s208 = scalar_lea.vmem %s0, %s207
          %s209 = smul.u32 2, %s22
        $region36: #{tpu_custom_call.1} parent=31 // pred_fallthru
          _
      $region32: #{tpu_custom_call.1} parent=5 // pred_fallthru
        _
      %p210 = scmp.le.s32.totalorder 1, %s14
      %p211 = scmp.lt.s32.totalorder %s14, 3
      %p212 = pnand %p210, %p211
      %p213 = pneg %p212
      // Predicated region
      $region37: #{tpu_custom_call.1} parent=5 // pred_check
        _
      $region38: #{tpu_custom_call.1} parent=5 // pred_check_branch
        %215 = sbr.rel (%p212) target = $region40
      $region39: #{tpu_custom_call.1} parent=5 // pred_region
        %s216 = ssub.s32 %s14, 1
        %s217 = smul.u32 2, %s24
        %p218 = scmp.lt.s32.totalorder %s23, 1
        %s219 = scalar_select %p218, %s23, 1
        %p220 = scmp.lt.s32.totalorder %s217, 1
        %s221 = scalar_select %p220, %s217, 1
        %s222 = smul.addr %s219, 16
        %s223 = sadd.s32 %s221, %s222
        %s224 = smul.addr %s223, 4
        %s225 = scalar_lea.vmem %s0, %s224
        %p226 = pneg %p54
        %p227 = pneg %p51
        %p228 = pneg %p75
        %p229 = pneg %p72
        %p230 = pneg %p96
        %p231 = pneg %p93
        %p232 = pneg %p117
        %p233 = pneg %p114
        %p234 = pneg %p138
        %p235 = pneg %p135
        %p236 = pneg %p166
        %p237 = pneg %p163
        %s238 = sand.u32 %s153, 1
        %s239 = scalar_lea.sflag [#allocation3], %s238
        %s240 = sand.u32 %s153, 1
        %s241 = smul.addr %s240, 16
        %s242 = scalar_lea.vmem [#allocation2], %s241
        %s243 = smul.u32 2, %s24
        %p244 = scmp.lt.s32.totalorder %s23, 1
        %s245 = scalar_select %p244, %s23, 1
        %p246 = scmp.lt.s32.totalorder %s243, 1
        %s247 = scalar_select %p246, %s243, 1
        %s248 = smul.addr %s245, 16
        %s249 = sadd.s32 %s247, %s248
        %s250 = smul.addr %s249, 4
        %s251 = scalar_lea.vmem %s0, %s250
        %s252 = smul.u32 2, %s24
        %s253 = smul.u32 2, %s24
        %v255 = vld [vmem:[%s251] sm:$0xf]
        %v256 = vld [vmem:[%s251 + $0x4] sm:$0xf]
        %v257 = vld [vmem:[%s251 + $0x8] sm:$0xf]
        %v258 = vld [vmem:[%s251 + $0xc] sm:$0xf]
        %v259 = vld [vmem:[%s251 + $0x10] sm:$0xf]
        %v260 = vld [vmem:[%s251 + $0x14] sm:$0xf]
        %v261 = vld [vmem:[%s251 + $0x18] sm:$0xf]
        %v262 = vld [vmem:[%s251 + $0x1c] sm:$0xf]
        %v263 = vld [vmem:[%s251 + $0x20] sm:$0xf]
        %v264 = vld [vmem:[%s251 + $0x24] sm:$0xf]
        %v265 = vld [vmem:[%s251 + $0x28] sm:$0xf]
        %v266 = vld [vmem:[%s251 + $0x2c] sm:$0xf]
        %v267 = vld [vmem:[%s251 + $0x30] sm:$0xf]
        %v268 = vld [vmem:[%s251 + $0x34] sm:$0xf]
        %v269 = vld [vmem:[%s251 + $0x38] sm:$0xf]
        %v270 = vld [vmem:[%s251 + $0x3c] sm:$0xf]
        %v271 = vld [vmem:[%s1] sm:$0xf]
        %v272 = vld [vmem:[%s1 + $0x4] sm:$0x3]
        %v273 = vld [vmem:[%s2] sm:$0x1]
        %v275 = vlaneseq
        %v276 = vshrl.u32 %v275, 7
        %v277 = vsub.s32 0, %v276
        %v278 = vrot.slane %v273, %v277
        %v296 = vunpack.c.l.b16 %v255
        %v297 = vunpack.c.l.b16 %v256
        %v298 = vunpack.c.l.b16 %v257
        %v299 = vunpack.c.l.b16 %v258
        %v300 = vunpack.c.l.b16 %v259
        %v301 = vunpack.c.l.b16 %v260
        %v302 = vunpack.c.l.b16 %v261
        %v303 = vunpack.c.l.b16 %v262
        %v304 = vunpack.c.l.b16 %v263
        %v305 = vunpack.c.l.b16 %v264
        %v306 = vunpack.c.l.b16 %v265
        %v307 = vunpack.c.l.b16 %v266
        %v308 = vunpack.c.l.b16 %v267
        %v309 = vunpack.c.l.b16 %v268
        %v310 = vunpack.c.l.b16 %v269
        %v311 = vunpack.c.l.b16 %v270
        %v312 = vpack.c.b16 %v297, %v296
        %v313 = vpack.c.b16 %v299, %v298
        %v314 = vpack.c.b16 %v301, %v300
        %v315 = vpack.c.b16 %v303, %v302
        %v316 = vpack.c.b16 %v305, %v304
        %v317 = vpack.c.b16 %v307, %v306
        %v318 = vpack.c.b16 %v309, %v308
        %v319 = vpack.c.b16 %v311, %v310
        %v322 = vunpack.c.l.b16 %v271
        %v323 = vunpack.c.l.b16 %v272
        %v324 = vpack.c.b16 %v323, %v322
        %vm325 = vcmask 89088
        %v327 = vsel %vm325, %v312, 0
        %v330 = vsel %vm325, %v313, 0
        %v333 = vsel %vm325, %v314, 0
        %v336 = vsel %vm325, %v315, 0
        %v339 = vsel %vm325, %v316, 0
        %v342 = vsel %vm325, %v317, 0
        %v345 = vsel %vm325, %v318, 0
        %v348 = vsel %vm325, %v319, 0
        %vm350 = vcmask 1044480
        %vm351 = vcmask 1045504
        %v352 = vsel %vm350, 4294967295, 65535
        %v353 = vsel %vm351, %v352, 0
        %v355 = vand.u32 %v324, %v353
        %357 = vmatprep.subr.bf16.mxu0 0
        %358 = vmatpush1.bf16.msra.mxu0 %v355
        %359 = vmatprep.subr.bf16.mxu0 0
        %360 = vmatpush1.bf16.msra.mxu0 0
        %361 = vmatprep.subr.bf16.mxu0 0
        %362 = vmatpush1.bf16.msra.mxu0 0
        %363 = vmatprep.subr.bf16.mxu0 0
        %364 = vmatpush1.bf16.msra.mxu0 0
        %365 = vmatprep.subr.bf16.mxu0 0
        %366 = vmatpush1.bf16.msra.mxu0 0
        %367 = vmatprep.subr.bf16.mxu0 0
        %368 = vmatpush1.bf16.msra.mxu0 0
        %369 = vmatprep.subr.bf16.mxu0 0
        %370 = vmatpush1.bf16.msra.mxu0 0
        %371 = vmatprep.subr.bf16.mxu0 0
        %372 = vmatpush1.bf16.msra.mxu0 0
        %373 = vmatprep.subr.bf16.mxu0 0
        %374 = vmatpush1.bf16.msra.mxu0 0
        %375 = vmatprep.subr.bf16.mxu0 0
        %376 = vmatpush1.bf16.msra.mxu0 0
        %377 = vmatprep.subr.bf16.mxu0 0
        %378 = vmatpush1.bf16.msra.mxu0 0
        %379 = vmatprep.subr.bf16.mxu0 0
        %380 = vmatpush1.bf16.msra.mxu0 0
        %381 = vmatprep.subr.bf16.mxu0 0
        %382 = vmatpush1.bf16.msra.mxu0 0
        %383 = vmatprep.subr.bf16.mxu0 0
        %384 = vmatpush1.bf16.msra.mxu0 0
        %385 = vmatprep.subr.bf16.mxu0 0
        %386 = vmatpush1.bf16.msra.mxu0 0
        %387 = vmatprep.subr.bf16.mxu0 0
        %388 = vmatpush1.bf16.msra.mxu0 0
        %389 = vmatprep.mubr.bf16.mxu0 0
        %390 = vmatmul.mubr.bf16.gmra.mrb[0].mxu0 %v327
        %v391 = vpop.f32.mrb[0].mxu0
        %v392 = vadd.f32 %v278, %v391
        %v393 = vpop.f32.mrb[0].mxu0
        %v394 = vpop.f32.mrb[0].mxu0
        %v395 = vadd.f32 %v278, %v394
        %v396 = vpop.f32.mrb[0].mxu0
        %397 = vmatprep.mubr.bf16.mxu0 0
        %398 = vmatmul.mubr.bf16.gmra.mrb[0].mxu0 %v330
        %v399 = vpop.f32.mrb[0].mxu0
        %v400 = vadd.f32 %v278, %v399
        %v401 = vpop.f32.mrb[0].mxu0
        %v402 = vpop.f32.mrb[0].mxu0
        %v403 = vadd.f32 %v278, %v402
        %v404 = vpop.f32.mrb[0].mxu0
        %405 = vmatprep.mubr.bf16.mxu0 0
        %406 = vmatmul.mubr.bf16.gmra.mrb[0].mxu0 %v333
        %v407 = vpop.f32.mrb[0].mxu0
        %v408 = vadd.f32 %v278, %v407
        %v409 = vpop.f32.mrb[0].mxu0
        %v410 = vpop.f32.mrb[0].mxu0
        %v411 = vadd.f32 %v278, %v410
        %v412 = vpop.f32.mrb[0].mxu0
        %413 = vmatprep.mubr.bf16.mxu0 0
        %414 = vmatmul.mubr.bf16.gmra.mrb[0].mxu0 %v336
        %v415 = vpop.f32.mrb[0].mxu0
        %v416 = vadd.f32 %v278, %v415
        %v417 = vpop.f32.mrb[0].mxu0
        %v418 = vpop.f32.mrb[0].mxu0
        %v419 = vadd.f32 %v278, %v418
        %v420 = vpop.f32.mrb[0].mxu0
        %421 = vmatprep.mubr.bf16.mxu0 0
        %422 = vmatmul.mubr.bf16.gmra.mrb[0].mxu0 %v339
        %v423 = vpop.f32.mrb[0].mxu0
        %v424 = vadd.f32 %v278, %v423
        %v425 = vpop.f32.mrb[0].mxu0
        %v426 = vpop.f32.mrb[0].mxu0
        %v427 = vadd.f32 %v278, %v426
        %v428 = vpop.f32.mrb[0].mxu0
        %429 = vmatprep.mubr.bf16.mxu0 0
        %430 = vmatmul.mubr.bf16.gmra.mrb[0].mxu0 %v342
        %v431 = vpop.f32.mrb[0].mxu0
        %v432 = vadd.f32 %v278, %v431
        %v433 = vpop.f32.mrb[0].mxu0
        %v434 = vpop.f32.mrb[0].mxu0
        %v435 = vadd.f32 %v278, %v434
        %v436 = vpop.f32.mrb[0].mxu0
        %437 = vmatprep.mubr.bf16.mxu0 0
        %438 = vmatmul.mubr.bf16.gmra.mrb[0].mxu0 %v345
        %v439 = vpop.f32.mrb[0].mxu0
        %v440 = vadd.f32 %v278, %v439
        %v441 = vpop.f32.mrb[0].mxu0
        %v442 = vpop.f32.mrb[0].mxu0
        %v443 = vadd.f32 %v278, %v442
        %v444 = vpop.f32.mrb[0].mxu0
        %445 = vmatprep.mubr.bf16.mxu0 0
        %446 = vmatmul.mubr.bf16.gmra.mrb[0].mxu0 %v348
        %v447 = vpop.f32.mrb[0].mxu0
        %v448 = vadd.f32 %v278, %v447
        %v449 = vpop.f32.mrb[0].mxu0
        %v450 = vpop.f32.mrb[0].mxu0
        %v451 = vadd.f32 %v278, %v450
        %v452 = vpop.f32.mrb[0].mxu0
        %453 = vdwg.mxu0
        %v454 = vmax.f32 %v392, 0.0
        %v455 = vmax.f32 %v395, 0.0
        %v456 = vmax.f32 %v400, 0.0
        %v457 = vmax.f32 %v403, 0.0
        %v458 = vmax.f32 %v408, 0.0
        %v459 = vmax.f32 %v411, 0.0
        %v460 = vmax.f32 %v416, 0.0
        %v461 = vmax.f32 %v419, 0.0
        %v462 = vmax.f32 %v424, 0.0
        %v463 = vmax.f32 %v427, 0.0
        %v464 = vmax.f32 %v432, 0.0
        %v465 = vmax.f32 %v435, 0.0
        %v466 = vmax.f32 %v440, 0.0
        %v467 = vmax.f32 %v443, 0.0
        %v468 = vmax.f32 %v448, 0.0
        %v469 = vmax.f32 %v451, 0.0
        %v470 = vpack.c.bf16 %v455, %v454
        %v471 = vpack.c.bf16 %v457, %v456
        %v472 = vpack.c.bf16 %v459, %v458
        %v473 = vpack.c.bf16 %v461, %v460
        %v474 = vpack.c.bf16 %v463, %v462
        %v475 = vpack.c.bf16 %v465, %v464
        %v476 = vpack.c.bf16 %v467, %v466
        %v477 = vpack.c.bf16 %v469, %v468
        %v478 = vld [vmem:[%s3] sm:$0xf]
        %v479 = vld [vmem:[%s3 + $0x4] sm:$0xf]
        %v480 = vld [vmem:[%s3 + $0x8] sm:$0xf]
        %v481 = vld [vmem:[%s3 + $0xc] sm:$0xf]
        %v482 = vld [vmem:[%s3 + $0x10] sm:$0xf]
        %v483 = vld [vmem:[%s3 + $0x14] sm:$0xf]
        %v484 = vld [vmem:[%s3 + $0x18] sm:$0xf]
        %v485 = vld [vmem:[%s3 + $0x1c] sm:$0xf]
        %v486 = vld [vmem:[%s3 + $0x20] sm:$0xf]
        %v487 = vld [vmem:[%s3 + $0x24] sm:$0xf]
        %v488 = vld [vmem:[%s3 + $0x28] sm:$0xf]
        %v489 = vld [vmem:[%s3 + $0x2c] sm:$0xf]
        %v490 = vld [vmem:[%s3 + $0x30] sm:$0xf]
        %v491 = vld [vmem:[%s3 + $0x34] sm:$0xf]
        %v492 = vld [vmem:[%s3 + $0x38] sm:$0xf]
        %v493 = vld [vmem:[%s3 + $0x3c] sm:$0xf]
        %v494 = vld [vmem:[%s4] sm:$0x1]
        %v496 = vlaneseq
        %v497 = vshrl.u32 %v496, 7
        %v498 = vsub.s32 0, %v497
        %v499 = vrot.slane %v494, %v498
        %v517 = vunpack.c.l.b16 %v478
        %v518 = vunpack.c.l.b16 %v479
        %v519 = vunpack.c.l.b16 %v480
        %v520 = vunpack.c.l.b16 %v481
        %v521 = vunpack.c.l.b16 %v482
        %v522 = vunpack.c.l.b16 %v483
        %v523 = vunpack.c.l.b16 %v484
        %v524 = vunpack.c.l.b16 %v485
        %v525 = vunpack.c.l.b16 %v486
        %v526 = vunpack.c.l.b16 %v487
        %v527 = vunpack.c.l.b16 %v488
        %v528 = vunpack.c.l.b16 %v489
        %v529 = vunpack.c.l.b16 %v490
        %v530 = vunpack.c.l.b16 %v491
        %v531 = vunpack.c.l.b16 %v492
        %v532 = vunpack.c.l.b16 %v493
        %v533 = vpack.c.b16 %v518, %v517
        %v534 = vpack.c.b16 %v520, %v519
        %v535 = vpack.c.b16 %v522, %v521
        %v536 = vpack.c.b16 %v524, %v523
        %v537 = vpack.c.b16 %v526, %v525
        %v538 = vpack.c.b16 %v528, %v527
        %v539 = vpack.c.b16 %v530, %v529
        %v540 = vpack.c.b16 %v532, %v531
        %549 = vmatprep.subr.bf16.mxu0 0
        %550 = vmatpush1.bf16.msra.mxu0 %v533
        %551 = vmatprep.subr.bf16.mxu0 0
        %552 = vmatpush1.bf16.msra.mxu0 %v534
        %553 = vmatprep.subr.bf16.mxu0 0
        %554 = vmatpush1.bf16.msra.mxu0 %v535
        %555 = vmatprep.subr.bf16.mxu0 0
        %556 = vmatpush1.bf16.msra.mxu0 %v536
        %557 = vmatprep.subr.bf16.mxu0 0
        %558 = vmatpush1.bf16.msra.mxu0 %v537
        %559 = vmatprep.subr.bf16.mxu0 0
        %560 = vmatpush1.bf16.msra.mxu0 %v538
        %561 = vmatprep.subr.bf16.mxu0 0
        %562 = vmatpush1.bf16.msra.mxu0 %v539
        %563 = vmatprep.subr.bf16.mxu0 0
        %564 = vmatpush1.bf16.msra.mxu0 %v540
        %565 = vmatprep.subr.bf16.mxu0 0
        %566 = vmatpush1.bf16.msra.mxu0 0
        %567 = vmatprep.subr.bf16.mxu0 0
        %568 = vmatpush1.bf16.msra.mxu0 0
        %569 = vmatprep.subr.bf16.mxu0 0
        %570 = vmatpush1.bf16.msra.mxu0 0
        %571 = vmatprep.subr.bf16.mxu0 0
        %572 = vmatpush1.bf16.msra.mxu0 0
        %573 = vmatprep.subr.bf16.mxu0 0
        %574 = vmatpush1.bf16.msra.mxu0 0
        %575 = vmatprep.subr.bf16.mxu0 0
        %576 = vmatpush1.bf16.msra.mxu0 0
        %577 = vmatprep.subr.bf16.mxu0 0
        %578 = vmatpush1.bf16.msra.mxu0 0
        %579 = vmatprep.subr.bf16.mxu0 0
        %580 = vmatpush1.bf16.msra.mxu0 0
        %581 = vmatprep.mubr.bf16.mxu0 0
        %582 = vmatmul.mubr.bf16.gmra.mrb[0].mxu0 %v470
        %v583 = vpop.f32.mrb[0].mxu0
        %v584 = vadd.f32 %v499, %v583
        %v585 = vpop.f32.mrb[0].mxu0
        %v586 = vpop.f32.mrb[0].mxu0
        %v587 = vadd.f32 %v499, %v586
        %v588 = vpop.f32.mrb[0].mxu0
        %589 = vmatprep.mubr.bf16.mxu0 0
        %590 = vmatmul.mubr.bf16.gmra.mrb[0].mxu0 %v471
        %v591 = vpop.f32.mrb[0].mxu0
        %v592 = vadd.f32 %v499, %v591
        %v593 = vpop.f32.mrb[0].mxu0
        %v594 = vpop.f32.mrb[0].mxu0
        %v595 = vadd.f32 %v499, %v594
        %v596 = vpop.f32.mrb[0].mxu0
        %597 = vmatprep.mubr.bf16.mxu0 0
        %598 = vmatmul.mubr.bf16.gmra.mrb[0].mxu0 %v472
        %v599 = vpop.f32.mrb[0].mxu0
        %v600 = vadd.f32 %v499, %v599
        %v601 = vpop.f32.mrb[0].mxu0
        %v602 = vpop.f32.mrb[0].mxu0
        %v603 = vadd.f32 %v499, %v602
        %v604 = vpop.f32.mrb[0].mxu0
        %605 = vmatprep.mubr.bf16.mxu0 0
        %606 = vmatmul.mubr.bf16.gmra.mrb[0].mxu0 %v473
        %v607 = vpop.f32.mrb[0].mxu0
        %v608 = vadd.f32 %v499, %v607
        %v609 = vpop.f32.mrb[0].mxu0
        %v610 = vpop.f32.mrb[0].mxu0
        %v611 = vadd.f32 %v499, %v610
        %v612 = vpop.f32.mrb[0].mxu0
        %613 = vmatprep.mubr.bf16.mxu0 0
        %614 = vmatmul.mubr.bf16.gmra.mrb[0].mxu0 %v474
        %v615 = vpop.f32.mrb[0].mxu0
        %v616 = vadd.f32 %v499, %v615
        %v617 = vpop.f32.mrb[0].mxu0
        %v618 = vpop.f32.mrb[0].mxu0
        %v619 = vadd.f32 %v499, %v618
        %v620 = vpop.f32.mrb[0].mxu0
        %621 = vmatprep.mubr.bf16.mxu0 0
        %622 = vmatmul.mubr.bf16.gmra.mrb[0].mxu0 %v475
        %v623 = vpop.f32.mrb[0].mxu0
        %v624 = vadd.f32 %v499, %v623
        %v625 = vpop.f32.mrb[0].mxu0
        %v626 = vpop.f32.mrb[0].mxu0
        %v627 = vadd.f32 %v499, %v626
        %v628 = vpop.f32.mrb[0].mxu0
        %629 = vmatprep.mubr.bf16.mxu0 0
        %630 = vmatmul.mubr.bf16.gmra.mrb[0].mxu0 %v476
        %v631 = vpop.f32.mrb[0].mxu0
        %v632 = vadd.f32 %v499, %v631
        %v633 = vpop.f32.mrb[0].mxu0
        %v634 = vpop.f32.mrb[0].mxu0
        %v635 = vadd.f32 %v499, %v634
        %v636 = vpop.f32.mrb[0].mxu0
        %637 = vmatprep.mubr.bf16.mxu0 0
        %638 = vmatmul.mubr.bf16.gmra.mrb[0].mxu0 %v477
        %v639 = vpop.f32.mrb[0].mxu0
        %v640 = vadd.f32 %v499, %v639
        %v641 = vpop.f32.mrb[0].mxu0
        %v642 = vpop.f32.mrb[0].mxu0
        %v643 = vadd.f32 %v499, %v642
        %v644 = vpop.f32.mrb[0].mxu0
        %645 = vdwg.mxu0
        %v646 = vmax.f32 %v584, %v600
        %v647 = vmax.f32 %v592, %v608
        %v648 = vmax.f32 %v646, %v616
        %v649 = vmax.f32 %v647, %v624
        %v650 = vmax.f32 %v648, %v632
        %v651 = vmax.f32 %v649, %v640
        %v652 = vmax.f32 %v650, %v651
        %v653 = vmax.f32 %v587, %v603
        %v654 = vmax.f32 %v595, %v611
        %v655 = vmax.f32 %v653, %v619
        %v656 = vmax.f32 %v654, %v627
        %v657 = vmax.f32 %v655, %v635
        %v658 = vmax.f32 %v656, %v643
        %v659 = vmax.f32 %v657, %v658
        %v660 = vmax.f32 %v652, 0.0
        %v661 = vmax.f32 %v659, 0.0
        %662 = vst [vmem:[%s242] sm:$0xff] %v660
        %663 = vst [vmem:[%s242 + $0x8] sm:$0xff] %v661
        %s664 = sand.u32 %s153, 1
        %s665 = scalar_lea.sflag [#allocation3], %s664
        %s666 = sand.u32 %s153, 1
        %s667 = smul.addr %s666, 16
        %s668 = scalar_lea.vmem [#allocation2], %s667
        // Predicated region
        $region41: #{tpu_custom_call.1} parent=39 // pred_check
          %p669 = pneg %p163
        $region42: #{tpu_custom_call.1} parent=39 // pred_check_branch
          %671 = sbr.rel (%p669) target = $region44
        $region43: #{tpu_custom_call.1} parent=39 // pred_region
          %s672 = smul.u32 2, %s24
          %s674 = ssub.s32 256, 256
          %675 = vsyncadd %s665, %s674
          %s676 = smul.addr %s23, 2
          %s677 = sadd.s32 %s672, %s676
          %s678 = smul.addr %s677, 128
          %s679 = scalar_lea.hbm %s5, %s678
          %s680 = sshll.u32 %s668, 4
          %s681 = int_to_ptr.vmem [resolvable:$true] %s680
          %686 = dma.vmem_to_hbm [thread:$0]  %s681, 256, %s679, %s665, 128, 128, 8
        $region44: #{tpu_custom_call.1} parent=39 // pred_fallthru
          _
      $region40: #{tpu_custom_call.1} parent=5 // pred_fallthru
        _
      %p687 = scmp.le.s32.totalorder 2, %s14
      // Predicated region
      $region45: #{tpu_custom_call.1} parent=5 // pred_check
        %p688 = pneg %p687
      $region46: #{tpu_custom_call.1} parent=5 // pred_check_branch
        %690 = sbr.rel (%p688) target = $region48
      $region47: #{tpu_custom_call.1} parent=5 // pred_region
        %s691 = ssub.s32 %s14, 2
        // Predicated region
        $region49: #{tpu_custom_call.1} parent=47 // pred_check
          %p692 = pneg %p169
        $region50: #{tpu_custom_call.1} parent=47 // pred_check_branch
          %694 = sbr.rel (%p692) target = $region52
        $region51: #{tpu_custom_call.1} parent=47 // pred_region
          %s695 = sand.u32 %s154, 1
          %s696 = scalar_lea.sflag [#allocation3], %s695
          %s697 = sand.u32 %s154, 1
          %s698 = smul.addr %s697, 16
          %s699 = scalar_lea.vmem [#allocation2], %s698
          %700 = dma.done %s696, 256
        $region52: #{tpu_custom_call.1} parent=47 // pred_fallthru
          _
      $region48: #{tpu_custom_call.1} parent=5 // pred_fallthru
        _
    $region6: #{tpu_custom_call.1} parent=1 // loop_footer
      %s18 = sadd.s32 1, %s14
    $region7: #{tpu_custom_call.1} parent=1 // loop_footer_branch
      %13 = sbr.rel target = $region3
    $region8: #{tpu_custom_call.1} parent=1 // loop_exit
      _
    %701 = vsyncpa [#allocation3], 1
    %s702 = scalar_lea.sflag [#allocation3], 1
    %703 = vsyncpa %s702, 1

</llo_original>
